<compile_context>
chip_gen: v7x
topology: tpu7x:2x2x1
jax: 0.10.0
libtpu: 0.0.40
codegen_flags: <defaults>
</compile_context>

<pallas_src>
import functools

import jax
import jax.numpy as jnp
from jax import lax
from jax.experimental import pallas as pl
from jax.experimental.pallas import tpu as pltpu


def _make_decomp_kernel(kernel_size, T, C):
    pad = (kernel_size - 1) // 2
    inv_k = 1.0 / float(kernel_size)

    def kernel(x_ref, res_ref, mean_ref):
        # Build the (T, T) moving-average matrix once per grid step (cheap:
        # ~T*T VPU ops vs. Bb*T*T*C MXU MACs).  Row t holds the weights of the
        # replicate-padded window centered at t:
        #   A[t, s] = (# taps of window t that land on source index s) / k
        ti = lax.broadcasted_iota(jnp.int32, (T, T), 0)   # output (row) index
        si = lax.broadcasted_iota(jnp.int32, (T, T), 1)   # source (col) index
        d = si - ti
        band = jnp.logical_and(d >= -pad, d <= pad).astype(jnp.float32)
        # Taps that fall off the ends are clamped to the first / last sample.
        left_extra = jnp.maximum(pad - ti, 0).astype(jnp.float32)
        right_extra = jnp.maximum(ti - (T - 1 - pad), 0).astype(jnp.float32)
        a = (band
             + jnp.where(si == 0, left_extra, 0.0)
             + jnp.where(si == T - 1, right_extra, 0.0)) * inv_k

        def body(i, carry):
            xi = x_ref[i].astype(jnp.float32)                       # (T, C)
            mi = jnp.dot(a, xi,
                         preferred_element_type=jnp.float32,
                         precision=lax.Precision.HIGHEST)           # MXU
            mean_ref[i] = mi.astype(mean_ref.dtype)
            res_ref[i] = (xi - mi).astype(res_ref.dtype)
            return carry

        lax.fori_loop(0, x_ref.shape[0], body, 0)

    return kernel


@functools.lru_cache(maxsize=None)
def _vmem_budget():
    """Return (per-block byte budget, vmem_limit_bytes) from physical VMEM."""
    phys = 64 << 20                      # conservative default (v7x-sized)
    try:
        phys = int(getattr(pltpu.get_tpu_info(), "vmem_capacity_bytes", phys))
    except Exception:
        pass
    limit = max(min(phys * 3 // 4, phys - (16 << 20)), 32 << 20)
    return int(limit * 0.8), limit


def _pick_batch_tile(B, T, C, itemsize, budget):
    """Largest batch tile whose block working set fits the VMEM budget.

    The time and channel axes are never split (full contiguous rows per DMA,
    no halo needed for the moving-average window); when B > 1 the tile is
    capped so the grid has >= 2 blocks (megacore sharding on multi-core TPUs).
    """
    padded_c = -(-C // 128) * 128                   # VMEM lane padding
    row_io = T * padded_c * 6 * itemsize            # 3 arrays x double buffer
    fixed = T * T * 4 + 4 * T * padded_c * 4        # A matrix + f32 row temps
    avail = max(budget - fixed, row_io)
    divisors = [d for d in range(1, B + 1) if B % d == 0]
    fits = [d for d in divisors if d * row_io <= avail] or [1]
    proper = [d for d in fits if d < B]              # guarantees >= 2 blocks
    if proper:
        return max(proper)
    return max(fits)


@functools.partial(jax.jit, static_argnames=("kernel_size",))
def series_decomp(x, kernel_size):
    """x: (B, T, C) -> (res, moving_mean); same semantics as the torch module.
    kernel_size must be odd (required for res = x - moving_mean)."""
    assert kernel_size % 2 == 1, "series_decomp requires an odd kernel_size"
    B, T, C = x.shape
    budget, vmem_limit = _vmem_budget()
    Bb = _pick_batch_tile(B, T, C, x.dtype.itemsize, budget)
    grid = (B // Bb,)
    spec = pl.BlockSpec((Bb, T, C), lambda b: (b, 0, 0))

    res, mean = pl.pallas_call(
        _make_decomp_kernel(kernel_size, T, C),
        out_shape=(jax.ShapeDtypeStruct((B, T, C), x.dtype),
                   jax.ShapeDtypeStruct((B, T, C), x.dtype)),
        grid=grid,
        in_specs=[spec],
        out_specs=(spec, spec),
        compiler_params=pltpu.CompilerParams(
            dimension_semantics=("parallel",),
            vmem_limit_bytes=vmem_limit),
    )(x)
    return res, mean


def series_decomp_ref(x, kernel_size):
    """Pure-JAX reference mirroring the PyTorch module, for verification."""
    pad = (kernel_size - 1) // 2
    front = jnp.repeat(x[:, 0:1, :], pad, axis=1)
    end = jnp.repeat(x[:, -1:, :], pad, axis=1)
    xp = jnp.concatenate([front, x, end], axis=1)
    T = x.shape[1]
    taps = jnp.stack([xp[:, j:j + T, :] for j in range(kernel_size)], axis=0)
    mean = jnp.mean(taps, axis=0)
    return x - mean, mean


if __name__ == "__main__":
    B, T, C = 2, 16, 8
    kernel_size = 7

    key = jax.random.PRNGKey(0)
    x = jax.random.normal(key, (B, T, C), jnp.float32)

    res, mean = series_decomp(x, kernel_size)
    res, mean = jax.block_until_ready((res, mean))

    res_ref, mean_ref = series_decomp_ref(x, kernel_size)
    assert res.shape == (B, T, C) and mean.shape == (B, T, C)
    assert bool(jnp.all(jnp.isfinite(res))) and bool(jnp.all(jnp.isfinite(mean)))
    assert bool(jnp.allclose(mean, mean_ref, atol=1e-4, rtol=1e-4))
    assert bool(jnp.allclose(res, res_ref, atol=1e-4, rtol=1e-4))
    print("KERNEL_OK")
</pallas_src>

<mosaic_0001>
module attributes {stable_mosaic.version = 11 : i64} {
  func.func @kernel(%arg0: i32, %arg1: memref<1x16x8xf32, #tpu.memory_space<vmem>>, %arg2: memref<1x16x8xf32, #tpu.memory_space<vmem>>, %arg3: memref<1x16x8xf32, #tpu.memory_space<vmem>>) attributes {dimension_semantics = [#tpu.dimension_semantics<parallel>], iteration_bounds = array<i64: 2>, scalar_prefetch = 0 : i64, scratch_operands = 0 : i64, tpu.core_type = #tpu.core_type<tc>, window_params = [{transform_indices = @transform_0, window_bounds = array<i64: 1, 16, 8>}, {transform_indices = @transform_1, window_bounds = array<i64: 1, 16, 8>}, {transform_indices = @transform_2, window_bounds = array<i64: 1, 16, 8>}]} {
    %0 = tpu.iota {dimensions = array<i32: 0>} : vector<16x16xi32>
    %1 = tpu.iota {dimensions = array<i32: 1>} : vector<16x16xi32>
    %2 = arith.subi %1, %0 : vector<16x16xi32>
    %c-3_i32 = arith.constant -3 : i32
    %3 = vector.broadcast %c-3_i32 : i32 to vector<16x16xi32>
    %4 = arith.cmpi sge, %2, %3 : vector<16x16xi32>
    %c3_i32 = arith.constant 3 : i32
    %5 = vector.broadcast %c3_i32 : i32 to vector<16x16xi32>
    %6 = arith.cmpi sle, %2, %5 : vector<16x16xi32>
    %7 = arith.andi %4, %6 : vector<16x16xi1>
    %8 = arith.extui %7 : vector<16x16xi1> to vector<16x16xi32>
    %9 = arith.sitofp %8 : vector<16x16xi32> to vector<16x16xf32>
    %c3_i32_0 = arith.constant 3 : i32
    %10 = vector.broadcast %c3_i32_0 : i32 to vector<16x16xi32>
    %11 = arith.subi %10, %0 : vector<16x16xi32>
    %c0_i32 = arith.constant 0 : i32
    %12 = vector.broadcast %c0_i32 : i32 to vector<16x16xi32>
    %13 = arith.maxsi %11, %12 : vector<16x16xi32>
    %14 = arith.sitofp %13 : vector<16x16xi32> to vector<16x16xf32>
    %c12_i32 = arith.constant 12 : i32
    %15 = vector.broadcast %c12_i32 : i32 to vector<16x16xi32>
    %16 = arith.subi %0, %15 : vector<16x16xi32>
    %c0_i32_1 = arith.constant 0 : i32
    %17 = vector.broadcast %c0_i32_1 : i32 to vector<16x16xi32>
    %18 = arith.maxsi %16, %17 : vector<16x16xi32>
    %19 = arith.sitofp %18 : vector<16x16xi32> to vector<16x16xf32>
    %c0_i32_2 = arith.constant 0 : i32
    %20 = vector.broadcast %c0_i32_2 : i32 to vector<16x16xi32>
    %21 = arith.cmpi eq, %1, %20 : vector<16x16xi32>
    %cst = arith.constant 0.000000e+00 : f32
    %22 = vector.broadcast %cst : f32 to vector<16x16xf32>
    %23 = arith.select %21, %14, %22 : vector<16x16xi1>, vector<16x16xf32>
    %24 = arith.addf %9, %23 : vector<16x16xf32>
    %c15_i32 = arith.constant 15 : i32
    %25 = vector.broadcast %c15_i32 : i32 to vector<16x16xi32>
    %26 = arith.cmpi eq, %1, %25 : vector<16x16xi32>
    %cst_3 = arith.constant 0.000000e+00 : f32
    %27 = vector.broadcast %cst_3 : f32 to vector<16x16xf32>
    %28 = arith.select %26, %19, %27 : vector<16x16xi1>, vector<16x16xf32>
    %29 = arith.addf %24, %28 : vector<16x16xf32>
    %cst_4 = arith.constant 0.142857149 : f32
    %30 = vector.broadcast %cst_4 : f32 to vector<16x16xf32>
    %31 = arith.mulf %29, %30 : vector<16x16xf32>
    %c0_i32_5 = arith.constant 0 : i32
    %32 = arith.index_cast %c0_i32_5 : i32 to index
    %c0 = arith.constant 0 : index
    %c0_6 = arith.constant 0 : index
    %33 = vector.load %arg1[%32, %c0, %c0_6] : memref<1x16x8xf32, #tpu.memory_space<vmem>>, vector<1x16x8xf32>
    %34 = vector.shape_cast %33 : vector<1x16x8xf32> to vector<16x8xf32>
    %cst_7 = arith.constant dense<0.000000e+00> : vector<16x8xf32>
    %35 = tpu.matmul %31, %34, %cst_7 {dimension_numbers = #tpu.dot_dimension_numbers<[1], [0], [0], [1], [0, 0, 1, 1], [], []>, precision = #tpu.contract_precision<fp32>} : vector<16x16xf32>, vector<16x8xf32>, vector<16x8xf32> -> vector<16x8xf32>
    %36 = arith.index_cast %c0_i32_5 : i32 to index
    %c0_8 = arith.constant 0 : index
    %c0_9 = arith.constant 0 : index
    %37 = vector.load %arg3[%36, %c0_8, %c0_9] : memref<1x16x8xf32, #tpu.memory_space<vmem>>, vector<1x16x8xf32>
    %38 = vector.shape_cast %37 : vector<1x16x8xf32> to vector<16x8xf32>
    %39 = vector.shape_cast %35 : vector<16x8xf32> to vector<1x16x8xf32>
    tpu.vector_store %arg3[%36, %c0_8, %c0_9], %39 {strides = array<i32>} : memref<1x16x8xf32, #tpu.memory_space<vmem>>, vector<1x16x8xf32>,
    %40 = arith.subf %34, %35 : vector<16x8xf32>
    %41 = arith.index_cast %c0_i32_5 : i32 to index
    %c0_10 = arith.constant 0 : index
    %c0_11 = arith.constant 0 : index
    %42 = vector.load %arg2[%41, %c0_10, %c0_11] : memref<1x16x8xf32, #tpu.memory_space<vmem>>, vector<1x16x8xf32>
    %43 = vector.shape_cast %42 : vector<1x16x8xf32> to vector<16x8xf32>
    %44 = vector.shape_cast %40 : vector<16x8xf32> to vector<1x16x8xf32>
    tpu.vector_store %arg2[%41, %c0_10, %c0_11], %44 {strides = array<i32>} : memref<1x16x8xf32, #tpu.memory_space<vmem>>, vector<1x16x8xf32>,
    %c1_i32 = arith.constant 1 : i32
    return
  }
  func.func @transform_0(%arg0: i32) -> (i32, i32, i32) {
    %c0_i32 = arith.constant 0 : i32
    %c0_i32_0 = arith.constant 0 : i32
    %c0_i32_1 = arith.constant 0 : i32
    return %arg0, %c0_i32, %c0_i32_0 : i32, i32, i32
  }
  func.func @transform_1(%arg0: i32) -> (i32, i32, i32) {
    %c0_i32 = arith.constant 0 : i32
    %c0_i32_0 = arith.constant 0 : i32
    %c0_i32_1 = arith.constant 0 : i32
    return %arg0, %c0_i32, %c0_i32_0 : i32, i32, i32
  }
  func.func @transform_2(%arg0: i32) -> (i32, i32, i32) {
    %c0_i32 = arith.constant 0 : i32
    %c0_i32_0 = arith.constant 0 : i32
    %c0_i32_1 = arith.constant 0 : i32
    return %arg0, %c0_i32, %c0_i32_0 : i32, i32, i32
  }
}

</mosaic_0001>

<llo_original>
// kernel: series_decomp.1
$region0: #{series_decomp.1}
  #allocation0 [shape = 'u32[]', space=smem, size = 0x4, offset = 0x4, fixed_abs, tag = 'smem constant byte address 0x4 - core index']
  #allocation1 [shape = 'u32[144,128]{1,0:T(1,128)}', space=vmem, size = 0x12000, scoped, tag = 'internal scratch']
  %s0 = inlined_call_operand.vmem [shape: f32[2,16,8], index: 0, kind: input, shape index: {}]
  %s1 = inlined_call_operand.vmem [shape: f32[2,16,8], index: 1, kind: output, shape index: {0}]
  %s2 = inlined_call_operand.vmem [shape: f32[2,16,8], index: 2, kind: output, shape index: {1}]
  %3 = xla_tuple %s1, %s2
  %s4 = sld [smem:[#allocation0]]
  $region45: #{series_decomp.1} parent=0
    _
  %s6 = ssub.s32 1, %s4
  %s7 = scalar_select 0, %s6, %s4
  loop: start=0, step=1, limit=4
  $region2: #{series_decomp.1} parent=0 // loop_pre_header
    _
  $region3: #{series_decomp.1} parent=0 // loop_header
    %s9 = sphi 0, %s13
    %p10 = scmp.ge.s32.totalorder %s9, 4
    %s19 = sphi 0, %s21
    %s22 = sphi 0, %s19
    %s23 = sphi 0, %s22
    %s39 = sphi 0, %s23
    %s45 = sphi 0, %s47
    %s48 = sphi 0, %s45
    %s49 = sphi 0, %s48
    %s65 = sphi 0, %s49
    %s71 = sphi 0, %s73
    %s74 = sphi 0, %s71
    %s75 = sphi 0, %s74
    %s91 = sphi 0, %s75
  $region4: #{series_decomp.1} parent=0 // loop_header_branch
    %12 = sbr.rel (%p10) target = $region8
  $region5: #{series_decomp.1} parent=0 // loop_body
    %s14 = ssub.s32 %s9, 1
    %s15 = ssub.s32 %s9, 2
    %s16 = sadd.s32 %s9, 1
    %s17 = ssub.s32 %s9, %s16
    %p18 = scmp.eq.s32.totalorder %s17, 0
    %s20 = sadd.s32 %s19, 1
    %s21 = scalar_select %p18, %s19, %s20
    %p24 = pneg %p18
    %p25 = scmp.eq.s32.totalorder %s9, 1
    %p26 = por %p24, %p25
    %p27 = scmp.ne.s32.totalorder %s19, %s22
    %p28 = scmp.eq.s32.totalorder %s9, 0
    %p29 = por %p27, %p28
    %p30 = scmp.ne.s32.totalorder %s19, %s22
    %p31 = scmp.eq.s32.totalorder %s14, 1
    %p32 = por %p30, %p31
    %p33 = scmp.ne.s32.totalorder %s22, %s23
    %p34 = scmp.eq.s32.totalorder %s14, 0
    %p35 = por %p33, %p34
    %p36 = scmp.ne.s32.totalorder %s22, %s23
    %p37 = scmp.eq.s32.totalorder %s15, 1
    %p38 = por %p36, %p37
    %p40 = scmp.ne.s32.totalorder %s23, %s39
    %p41 = scmp.eq.s32.totalorder %s15, 0
    %p42 = por %p40, %p41
    %s43 = ssub.s32 %s9, %s16
    %p44 = scmp.eq.s32.totalorder %s43, 0
    %s46 = sadd.s32 %s45, 1
    %s47 = scalar_select %p44, %s45, %s46
    %p50 = pneg %p44
    %p51 = scmp.eq.s32.totalorder %s9, 1
    %p52 = por %p50, %p51
    %p53 = scmp.ne.s32.totalorder %s45, %s48
    %p54 = scmp.eq.s32.totalorder %s9, 0
    %p55 = por %p53, %p54
    %p56 = scmp.ne.s32.totalorder %s45, %s48
    %p57 = scmp.eq.s32.totalorder %s14, 1
    %p58 = por %p56, %p57
    %p59 = scmp.ne.s32.totalorder %s48, %s49
    %p60 = scmp.eq.s32.totalorder %s14, 0
    %p61 = por %p59, %p60
    %p62 = scmp.ne.s32.totalorder %s48, %s49
    %p63 = scmp.eq.s32.totalorder %s15, 1
    %p64 = por %p62, %p63
    %p66 = scmp.ne.s32.totalorder %s49, %s65
    %p67 = scmp.eq.s32.totalorder %s15, 0
    %p68 = por %p66, %p67
    %s69 = ssub.s32 %s9, %s16
    %p70 = scmp.eq.s32.totalorder %s69, 0
    %s72 = sadd.s32 %s71, 1
    %s73 = scalar_select %p70, %s71, %s72
    %p76 = pneg %p70
    %p77 = scmp.eq.s32.totalorder %s9, 1
    %p78 = por %p76, %p77
    %p79 = scmp.ne.s32.totalorder %s71, %s74
    %p80 = scmp.eq.s32.totalorder %s9, 0
    %p81 = por %p79, %p80
    %p82 = scmp.ne.s32.totalorder %s71, %s74
    %p83 = scmp.eq.s32.totalorder %s14, 1
    %p84 = por %p82, %p83
    %p85 = scmp.ne.s32.totalorder %s74, %s75
    %p86 = scmp.eq.s32.totalorder %s14, 0
    %p87 = por %p85, %p86
    %p88 = scmp.ne.s32.totalorder %s74, %s75
    %p89 = scmp.eq.s32.totalorder %s15, 1
    %p90 = por %p88, %p89
    %p92 = scmp.ne.s32.totalorder %s75, %s91
    %p93 = scmp.eq.s32.totalorder %s15, 0
    %p94 = por %p92, %p93
    %p95 = scmp.le.s32.totalorder 1, %s9
    %p96 = scmp.lt.s32.totalorder %s9, 3
    %p97 = pnand %p95, %p96
    %p98 = pneg %p97
    // Predicated region
    $region9: #{series_decomp.1} parent=5 // pred_check
      _
    $region10: #{series_decomp.1} parent=5 // pred_check_branch
      %100 = sbr.rel (%p97) target = $region12
    $region11: #{series_decomp.1} parent=5 // pred_region
      %s101 = ssub.s32 %s9, 1
    $region12: #{series_decomp.1} parent=5 // pred_fallthru
      _
    %p102 = scmp.lt.s32.totalorder %s9, 2
    // Predicated region
    $region13: #{series_decomp.1} parent=5 // pred_check
      %p103 = pneg %p102
    $region14: #{series_decomp.1} parent=5 // pred_check_branch
      %105 = sbr.rel (%p103) target = $region16
    $region15: #{series_decomp.1} parent=5 // pred_region
      // Predicated region
      $region17: #{series_decomp.1} parent=15 // pred_check
        %p106 = pneg %p29
      $region18: #{series_decomp.1} parent=15 // pred_check_branch
        %108 = sbr.rel (%p106) target = $region20
      $region19: #{series_decomp.1} parent=15 // pred_region
        %p109 = scmp.lt.s32.totalorder %s9, 1
        %s110 = scalar_select %p109, %s9, 1
        %s111 = smul.addr %s110, 2
        %s112 = smul.addr %s111, 8
        %s113 = scalar_lea.vmem %s0, %s112
      $region20: #{series_decomp.1} parent=15 // pred_fallthru
        _
    $region16: #{series_decomp.1} parent=5 // pred_fallthru
      _
    %p114 = scmp.le.s32.totalorder 1, %s9
    %p115 = scmp.lt.s32.totalorder %s9, 3
    %p116 = pnand %p114, %p115
    %p117 = pneg %p116
    // Predicated region
    $region21: #{series_decomp.1} parent=5 // pred_check
      _
    $region22: #{series_decomp.1} parent=5 // pred_check_branch
      %119 = sbr.rel (%p116) target = $region24
    $region23: #{series_decomp.1} parent=5 // pred_region
      %s120 = ssub.s32 %s9, 1
      %p121 = scmp.lt.s32.totalorder %s14, 1
      %s122 = scalar_select %p121, %s14, 1
      %s123 = smul.addr %s122, 2
      %s124 = smul.addr %s123, 8
      %s125 = scalar_lea.vmem %s0, %s124
      %p126 = pneg %p35
      %p127 = pneg %p32
      %p128 = pneg %p61
      %p129 = pneg %p58
      %p130 = scmp.lt.s32.totalorder %s14, 1
      %s131 = scalar_select %p130, %s14, 1
      %s132 = smul.addr %s131, 2
      %s133 = smul.addr %s132, 8
      %s134 = scalar_lea.vmem %s1, %s133
      %p135 = pneg %p87
      %p136 = pneg %p84
      %p137 = scmp.lt.s32.totalorder %s14, 1
      %s138 = scalar_select %p137, %s14, 1
      %s139 = smul.addr %s138, 2
      %s140 = smul.addr %s139, 8
      %s141 = scalar_lea.vmem %s2, %s140
      %p142 = scmp.lt.s32.totalorder %s14, 1
      %s143 = scalar_select %p142, %s14, 1
      %s144 = smul.addr %s143, 2
      %s145 = smul.addr %s144, 8
      %s146 = scalar_lea.vmem %s0, %s145
      %p147 = scmp.lt.s32.totalorder %s14, 1
      %s148 = scalar_select %p147, %s14, 1
      %s149 = smul.addr %s148, 2
      %s150 = smul.addr %s149, 8
      %s151 = scalar_lea.vmem %s1, %s150
      %p152 = scmp.lt.s32.totalorder %s14, 1
      %s153 = scalar_select %p152, %s14, 1
      %s154 = smul.addr %s153, 2
      %s155 = smul.addr %s154, 8
      %s156 = scalar_lea.vmem %s2, %s155
      %v157 = vlaneseq
      %v158 = vshrl.u32 %v157, 7
      %v159 = vadd.s32 %v158, 8
      %v160 = vlaneseq
      %v161 = vand.u32 %v160, 127
      %v162 = vsub.s32 %v161, %v158
      %v163 = vsub.s32 %v161, %v159
      %vm164 = vcmp.ge.s32.totalorder %v162, 4294967293
      %vm165 = vcmp.ge.s32.totalorder %v163, 4294967293
      %vm166 = vcmp.le.s32.totalorder %v162, 3
      %vm167 = vcmp.le.s32.totalorder %v163, 3
      %vm168 = vmand %vm164, %vm166
      %vm169 = vmand %vm165, %vm167
      %v170 = vsel %vm168, 1, 0
      %v171 = vsel %vm169, 1, 0
      %v172 = vcvt.s32.f32 %v170
      %v173 = vcvt.s32.f32 %v171
      %v174 = vsub.s32 3, %v158
      %v175 = vsub.s32 3, %v159
      %vm176 = vcmp.gt.s32.totalorder %v174, 0
      %v177 = vsel %vm176, %v174, 0
      %vm178 = vcmp.gt.s32.totalorder %v175, 0
      %v179 = vsel %vm178, %v175, 0
      %v180 = vcvt.s32.f32 %v177
      %v181 = vcvt.s32.f32 %v179
      %v182 = vsub.s32 %v158, 12
      %v183 = vsub.s32 %v159, 12
      %vm184 = vcmp.gt.s32.totalorder %v182, 0
      %v185 = vsel %vm184, %v182, 0
      %vm186 = vcmp.gt.s32.totalorder %v183, 0
      %v187 = vsel %vm186, %v183, 0
      %v188 = vcvt.s32.f32 %v185
      %v189 = vcvt.s32.f32 %v187
      %vm190 = vcmp.eq.s32.totalorder %v161, 0
      %v191 = vsel %vm190, %v180, 0.0
      %v192 = vsel %vm190, %v181, 0.0
      %v193 = vadd.f32 %v172, %v191
      %v194 = vadd.f32 %v173, %v192
      %vm195 = vcmp.eq.s32.totalorder %v161, 15
      %v196 = vsel %vm195, %v188, 0.0
      %v197 = vsel %vm195, %v189, 0.0
      %v198 = vadd.f32 %v193, %v196
      %v199 = vadd.f32 %v194, %v197
      %v200 = vmul.f32 %v198, 0.14285715
      %v201 = vmul.f32 %v199, 0.14285715
      %v202 = vld [vmem:[%s146] sm:$0xff]
      %v203 = vld [vmem:[%s146 + $0x8] sm:$0xff]
      %vm204 = vcmask 130048
      %v206 = vsel %vm204, %v200, 0
      %v209 = vsel %vm204, %v201, 0
      %211 = vmatprep.subr.mxu0 0.0
      %v212 = vand.u32 %v202, 4294901760
      %213 = vmatpush1.msra.mxu0 %v212
      %214 = vmatprep.subr.mxu0 0.0
      %v215 = vand.u32 %v203, 4294901760
      %216 = vmatpush1.msra.mxu0 %v215
      %217 = vmatprep.subr.mxu0 0.0
      %218 = vmatpush1.msra.mxu0 0.0
      %219 = vmatprep.subr.mxu0 0.0
      %220 = vmatpush1.msra.mxu0 0.0
      %221 = vmatprep.subr.mxu0 0.0
      %222 = vmatpush1.msra.mxu0 0.0
      %223 = vmatprep.subr.mxu0 0.0
      %224 = vmatpush1.msra.mxu0 0.0
      %225 = vmatprep.subr.mxu0 0.0
      %226 = vmatpush1.msra.mxu0 0.0
      %227 = vmatprep.subr.mxu0 0.0
      %228 = vmatpush1.msra.mxu0 0.0
      %229 = vmatprep.subr.mxu0 0.0
      %230 = vmatpush1.msra.mxu0 0.0
      %231 = vmatprep.subr.mxu0 0.0
      %232 = vmatpush1.msra.mxu0 0.0
      %233 = vmatprep.subr.mxu0 0.0
      %234 = vmatpush1.msra.mxu0 0.0
      %235 = vmatprep.subr.mxu0 0.0
      %236 = vmatpush1.msra.mxu0 0.0
      %237 = vmatprep.subr.mxu0 0.0
      %238 = vmatpush1.msra.mxu0 0.0
      %239 = vmatprep.subr.mxu0 0.0
      %240 = vmatpush1.msra.mxu0 0.0
      %241 = vmatprep.subr.mxu0 0.0
      %242 = vmatpush1.msra.mxu0 0.0
      %243 = vmatprep.subr.mxu0 0.0
      %244 = vmatpush1.msra.mxu0 0.0
      %245 = vmatprep.subr.mxu0 0.0
      %246 = vmatpush1.msra.mxu0 0.0
      %247 = vmatprep.subr.mxu0 0.0
      %248 = vmatpush1.msra.mxu0 0.0
      %249 = vmatprep.subr.mxu0 0.0
      %250 = vmatpush1.msra.mxu0 0.0
      %251 = vmatprep.subr.mxu0 0.0
      %252 = vmatpush1.msra.mxu0 0.0
      %253 = vmatprep.subr.mxu0 0.0
      %254 = vmatpush1.msra.mxu0 0.0
      %255 = vmatprep.subr.mxu0 0.0
      %256 = vmatpush1.msra.mxu0 0.0
      %257 = vmatprep.subr.mxu0 0.0
      %258 = vmatpush1.msra.mxu0 0.0
      %259 = vmatprep.subr.mxu0 0.0
      %260 = vmatpush1.msra.mxu0 0.0
      %261 = vmatprep.subr.mxu0 0.0
      %262 = vmatpush1.msra.mxu0 0.0
      %263 = vmatprep.subr.mxu0 0.0
      %264 = vmatpush1.msra.mxu0 0.0
      %265 = vmatprep.subr.mxu0 0.0
      %266 = vmatpush1.msra.mxu0 0.0
      %267 = vmatprep.subr.mxu0 0.0
      %268 = vmatpush1.msra.mxu0 0.0
      %269 = vmatprep.subr.mxu0 0.0
      %270 = vmatpush1.msra.mxu0 0.0
      %271 = vmatprep.subr.mxu0 0.0
      %272 = vmatpush1.msra.mxu0 0.0
      %273 = vmatprep.subr.mxu0 0.0
      %274 = vmatpush1.msra.mxu0 0.0
      %275 = vmatprep.subr.mxu0 0.0
      %276 = vmatpush1.msra.mxu0 0.0
      %277 = vmatprep.mubr.f32.mxu0 0.0
      %v278 = vand.u32 %v206, 4294901760
      %v279 = vsub.f32 %v206, %v278
      %v280 = vand.u32 %v279, 4294901760
      %v281 = vsub.f32 %v279, %v280
      %v282 = vand.u32 %v281, 4294901760
      %283 = vmatmul.mubr.f32.gmra.mrb[0].mxu0 %v282
      %v284 = vpop.f32.mrb[0].mxu0
      %v285 = vadd.f32 0.0, %v284
      %v286 = vpop.f32.mrb[0].mxu0
      %287 = vmatprep.mubr.f32.mxu0 0.0
      %v288 = vand.u32 %v209, 4294901760
      %v289 = vsub.f32 %v209, %v288
      %v290 = vand.u32 %v289, 4294901760
      %v291 = vsub.f32 %v289, %v290
      %v292 = vand.u32 %v291, 4294901760
      %293 = vmatmul.mubr.f32.gmra.mrb[0].mxu0 %v292
      %v294 = vpop.f32.mrb[0].mxu0
      %v295 = vadd.f32 0.0, %v294
      %v296 = vpop.f32.mrb[0].mxu0
      %297 = vdwg.mxu0
      %298 = vmatprep.subr.mxu0 0.0
      %v299 = vand.u32 %v202, 4294901760
      %v300 = vsub.f32 %v202, %v299
      %v301 = vand.u32 %v300, 4294901760
      %v302 = vsub.f32 %v300, %v301
      %v303 = vand.u32 %v302, 4294901760
      %304 = vmatpush1.msra.mxu0 %v303
      %305 = vmatprep.subr.mxu0 0.0
      %v306 = vand.u32 %v203, 4294901760
      %v307 = vsub.f32 %v203, %v306
      %v308 = vand.u32 %v307, 4294901760
      %v309 = vsub.f32 %v307, %v308
      %v310 = vand.u32 %v309, 4294901760
      %311 = vmatpush1.msra.mxu0 %v310
      %312 = vmatprep.subr.mxu0 0.0
      %313 = vmatpush1.msra.mxu0 0.0
      %314 = vmatprep.subr.mxu0 0.0
      %315 = vmatpush1.msra.mxu0 0.0
      %316 = vmatprep.subr.mxu0 0.0
      %317 = vmatpush1.msra.mxu0 0.0
      %318 = vmatprep.subr.mxu0 0.0
      %319 = vmatpush1.msra.mxu0 0.0
      %320 = vmatprep.subr.mxu0 0.0
      %321 = vmatpush1.msra.mxu0 0.0
      %322 = vmatprep.subr.mxu0 0.0
      %323 = vmatpush1.msra.mxu0 0.0
      %324 = vmatprep.subr.mxu0 0.0
      %325 = vmatpush1.msra.mxu0 0.0
      %326 = vmatprep.subr.mxu0 0.0
      %327 = vmatpush1.msra.mxu0 0.0
      %328 = vmatprep.subr.mxu0 0.0
      %329 = vmatpush1.msra.mxu0 0.0
      %330 = vmatprep.subr.mxu0 0.0
      %331 = vmatpush1.msra.mxu0 0.0
      %332 = vmatprep.subr.mxu0 0.0
      %333 = vmatpush1.msra.mxu0 0.0
      %334 = vmatprep.subr.mxu0 0.0
      %335 = vmatpush1.msra.mxu0 0.0
      %336 = vmatprep.subr.mxu0 0.0
      %337 = vmatpush1.msra.mxu0 0.0
      %338 = vmatprep.subr.mxu0 0.0
      %339 = vmatpush1.msra.mxu0 0.0
      %340 = vmatprep.subr.mxu0 0.0
      %341 = vmatpush1.msra.mxu0 0.0
      %342 = vmatprep.subr.mxu0 0.0
      %343 = vmatpush1.msra.mxu0 0.0
      %344 = vmatprep.subr.mxu0 0.0
      %345 = vmatpush1.msra.mxu0 0.0
      %346 = vmatprep.subr.mxu0 0.0
      %347 = vmatpush1.msra.mxu0 0.0
      %348 = vmatprep.subr.mxu0 0.0
      %349 = vmatpush1.msra.mxu0 0.0
      %350 = vmatprep.subr.mxu0 0.0
      %351 = vmatpush1.msra.mxu0 0.0
      %352 = vmatprep.subr.mxu0 0.0
      %353 = vmatpush1.msra.mxu0 0.0
      %354 = vmatprep.subr.mxu0 0.0
      %355 = vmatpush1.msra.mxu0 0.0
      %356 = vmatprep.subr.mxu0 0.0
      %357 = vmatpush1.msra.mxu0 0.0
      %358 = vmatprep.subr.mxu0 0.0
      %359 = vmatpush1.msra.mxu0 0.0
      %360 = vmatprep.subr.mxu0 0.0
      %361 = vmatpush1.msra.mxu0 0.0
      %362 = vmatprep.subr.mxu0 0.0
      %363 = vmatpush1.msra.mxu0 0.0
      %364 = vmatprep.subr.mxu0 0.0
      %365 = vmatpush1.msra.mxu0 0.0
      %366 = vmatprep.subr.mxu0 0.0
      %367 = vmatpush1.msra.mxu0 0.0
      %368 = vmatprep.subr.mxu0 0.0
      %369 = vmatpush1.msra.mxu0 0.0
      %370 = vmatprep.subr.mxu0 0.0
      %371 = vmatpush1.msra.mxu0 0.0
      %372 = vmatprep.mubr.f32.mxu0 0.0
      %v373 = vand.u32 %v206, 4294901760
      %374 = vmatmul.mubr.f32.gmra.mrb[0].mxu0 %v373
      %v375 = vpop.f32.mrb[0].mxu0
      %v376 = vadd.f32 %v285, %v375
      %v377 = vpop.f32.mrb[0].mxu0
      %378 = vmatprep.mubr.f32.mxu0 0.0
      %v379 = vand.u32 %v209, 4294901760
      %380 = vmatmul.mubr.f32.gmra.mrb[0].mxu0 %v379
      %v381 = vpop.f32.mrb[0].mxu0
      %v382 = vadd.f32 %v295, %v381
      %v383 = vpop.f32.mrb[0].mxu0
      %384 = vdwg.mxu0
      %385 = vmatprep.subr.mxu0 0.0
      %v386 = vand.u32 %v202, 4294901760
      %v387 = vsub.f32 %v202, %v386
      %388 = vmatpush1.msra.mxu0 %v387
      %389 = vmatprep.subr.mxu0 0.0
      %v390 = vand.u32 %v203, 4294901760
      %v391 = vsub.f32 %v203, %v390
      %392 = vmatpush1.msra.mxu0 %v391
      %393 = vmatprep.subr.mxu0 0.0
      %394 = vmatpush1.msra.mxu0 0.0
      %395 = vmatprep.subr.mxu0 0.0
      %396 = vmatpush1.msra.mxu0 0.0
      %397 = vmatprep.subr.mxu0 0.0
      %398 = vmatpush1.msra.mxu0 0.0
      %399 = vmatprep.subr.mxu0 0.0
      %400 = vmatpush1.msra.mxu0 0.0
      %401 = vmatprep.subr.mxu0 0.0
      %402 = vmatpush1.msra.mxu0 0.0
      %403 = vmatprep.subr.mxu0 0.0
      %404 = vmatpush1.msra.mxu0 0.0
      %405 = vmatprep.subr.mxu0 0.0
      %406 = vmatpush1.msra.mxu0 0.0
      %407 = vmatprep.subr.mxu0 0.0
      %408 = vmatpush1.msra.mxu0 0.0
      %409 = vmatprep.subr.mxu0 0.0
      %410 = vmatpush1.msra.mxu0 0.0
      %411 = vmatprep.subr.mxu0 0.0
      %412 = vmatpush1.msra.mxu0 0.0
      %413 = vmatprep.subr.mxu0 0.0
      %414 = vmatpush1.msra.mxu0 0.0
      %415 = vmatprep.subr.mxu0 0.0
      %416 = vmatpush1.msra.mxu0 0.0
      %417 = vmatprep.subr.mxu0 0.0
      %418 = vmatpush1.msra.mxu0 0.0
      %419 = vmatprep.subr.mxu0 0.0
      %420 = vmatpush1.msra.mxu0 0.0
      %421 = vmatprep.subr.mxu0 0.0
      %422 = vmatpush1.msra.mxu0 0.0
      %423 = vmatprep.subr.mxu0 0.0
      %424 = vmatpush1.msra.mxu0 0.0
      %425 = vmatprep.subr.mxu0 0.0
      %426 = vmatpush1.msra.mxu0 0.0
      %427 = vmatprep.subr.mxu0 0.0
      %428 = vmatpush1.msra.mxu0 0.0
      %429 = vmatprep.subr.mxu0 0.0
      %430 = vmatpush1.msra.mxu0 0.0
      %431 = vmatprep.subr.mxu0 0.0
      %432 = vmatpush1.msra.mxu0 0.0
      %433 = vmatprep.subr.mxu0 0.0
      %434 = vmatpush1.msra.mxu0 0.0
      %435 = vmatprep.subr.mxu0 0.0
      %436 = vmatpush1.msra.mxu0 0.0
      %437 = vmatprep.subr.mxu0 0.0
      %438 = vmatpush1.msra.mxu0 0.0
      %439 = vmatprep.subr.mxu0 0.0
      %440 = vmatpush1.msra.mxu0 0.0
      %441 = vmatprep.subr.mxu0 0.0
      %442 = vmatpush1.msra.mxu0 0.0
      %443 = vmatprep.subr.mxu0 0.0
      %444 = vmatpush1.msra.mxu0 0.0
      %445 = vmatprep.subr.mxu0 0.0
      %446 = vmatpush1.msra.mxu0 0.0
      %447 = vmatprep.subr.mxu0 0.0
      %448 = vmatpush1.msra.mxu0 0.0
      %449 = vmatprep.subr.mxu0 0.0
      %450 = vmatpush1.msra.mxu0 0.0
      %451 = vmatprep.subr.mxu0 0.0
      %452 = vmatpush1.msra.mxu0 0.0
      %453 = vmatprep.mubr.f32.mxu0 0.0
      %v454 = vand.u32 %v206, 4294901760
      %v455 = vsub.f32 %v206, %v454
      %456 = vmatmul.mubr.f32.gmra.mrb[0].mxu0 %v455
      %v457 = vpop.f32.mrb[0].mxu0
      %v458 = vadd.f32 %v376, %v457
      %v459 = vpop.f32.mrb[0].mxu0
      %460 = vmatprep.mubr.f32.mxu0 0.0
      %v461 = vand.u32 %v209, 4294901760
      %v462 = vsub.f32 %v209, %v461
      %463 = vmatmul.mubr.f32.gmra.mrb[0].mxu0 %v462
      %v464 = vpop.f32.mrb[0].mxu0
      %v465 = vadd.f32 %v382, %v464
      %v466 = vpop.f32.mrb[0].mxu0
      %467 = vdwg.mxu0
      %468 = vmatprep.subr.mxu0 0.0
      %v469 = vand.u32 %v202, 4294901760
      %470 = vmatpush1.msra.mxu0 %v469
      %471 = vmatprep.subr.mxu0 0.0
      %v472 = vand.u32 %v203, 4294901760
      %473 = vmatpush1.msra.mxu0 %v472
      %474 = vmatprep.subr.mxu0 0.0
      %475 = vmatpush1.msra.mxu0 0.0
      %476 = vmatprep.subr.mxu0 0.0
      %477 = vmatpush1.msra.mxu0 0.0
      %478 = vmatprep.subr.mxu0 0.0
      %479 = vmatpush1.msra.mxu0 0.0
      %480 = vmatprep.subr.mxu0 0.0
      %481 = vmatpush1.msra.mxu0 0.0
      %482 = vmatprep.subr.mxu0 0.0
      %483 = vmatpush1.msra.mxu0 0.0
      %484 = vmatprep.subr.mxu0 0.0
      %485 = vmatpush1.msra.mxu0 0.0
      %486 = vmatprep.subr.mxu0 0.0
      %487 = vmatpush1.msra.mxu0 0.0
      %488 = vmatprep.subr.mxu0 0.0
      %489 = vmatpush1.msra.mxu0 0.0
      %490 = vmatprep.subr.mxu0 0.0
      %491 = vmatpush1.msra.mxu0 0.0
      %492 = vmatprep.subr.mxu0 0.0
      %493 = vmatpush1.msra.mxu0 0.0
      %494 = vmatprep.subr.mxu0 0.0
      %495 = vmatpush1.msra.mxu0 0.0
      %496 = vmatprep.subr.mxu0 0.0
      %497 = vmatpush1.msra.mxu0 0.0
      %498 = vmatprep.subr.mxu0 0.0
      %499 = vmatpush1.msra.mxu0 0.0
      %500 = vmatprep.subr.mxu0 0.0
      %501 = vmatpush1.msra.mxu0 0.0
      %502 = vmatprep.subr.mxu0 0.0
      %503 = vmatpush1.msra.mxu0 0.0
      %504 = vmatprep.subr.mxu0 0.0
      %505 = vmatpush1.msra.mxu0 0.0
      %506 = vmatprep.subr.mxu0 0.0
      %507 = vmatpush1.msra.mxu0 0.0
      %508 = vmatprep.subr.mxu0 0.0
      %509 = vmatpush1.msra.mxu0 0.0
      %510 = vmatprep.subr.mxu0 0.0
      %511 = vmatpush1.msra.mxu0 0.0
      %512 = vmatprep.subr.mxu0 0.0
      %513 = vmatpush1.msra.mxu0 0.0
      %514 = vmatprep.subr.mxu0 0.0
      %515 = vmatpush1.msra.mxu0 0.0
      %516 = vmatprep.subr.mxu0 0.0
      %517 = vmatpush1.msra.mxu0 0.0
      %518 = vmatprep.subr.mxu0 0.0
      %519 = vmatpush1.msra.mxu0 0.0
      %520 = vmatprep.subr.mxu0 0.0
      %521 = vmatpush1.msra.mxu0 0.0
      %522 = vmatprep.subr.mxu0 0.0
      %523 = vmatpush1.msra.mxu0 0.0
      %524 = vmatprep.subr.mxu0 0.0
      %525 = vmatpush1.msra.mxu0 0.0
      %526 = vmatprep.subr.mxu0 0.0
      %527 = vmatpush1.msra.mxu0 0.0
      %528 = vmatprep.subr.mxu0 0.0
      %529 = vmatpush1.msra.mxu0 0.0
      %530 = vmatprep.subr.mxu0 0.0
      %531 = vmatpush1.msra.mxu0 0.0
      %532 = vmatprep.subr.mxu0 0.0
      %533 = vmatpush1.msra.mxu0 0.0
      %534 = vmatprep.mubr.f32.mxu0 0.0
      %v535 = vand.u32 %v206, 4294901760
      %v536 = vsub.f32 %v206, %v535
      %v537 = vand.u32 %v536, 4294901760
      %538 = vmatmul.mubr.f32.gmra.mrb[0].mxu0 %v537
      %v539 = vpop.f32.mrb[0].mxu0
      %v540 = vadd.f32 %v458, %v539
      %v541 = vpop.f32.mrb[0].mxu0
      %542 = vmatprep.mubr.f32.mxu0 0.0
      %v543 = vand.u32 %v209, 4294901760
      %v544 = vsub.f32 %v209, %v543
      %v545 = vand.u32 %v544, 4294901760
      %546 = vmatmul.mubr.f32.gmra.mrb[0].mxu0 %v545
      %v547 = vpop.f32.mrb[0].mxu0
      %v548 = vadd.f32 %v465, %v547
      %v549 = vpop.f32.mrb[0].mxu0
      %550 = vdwg.mxu0
      %551 = vmatprep.subr.mxu0 0.0
      %v552 = vand.u32 %v202, 4294901760
      %v553 = vsub.f32 %v202, %v552
      %v554 = vand.u32 %v553, 4294901760
      %555 = vmatpush1.msra.mxu0 %v554
      %556 = vmatprep.subr.mxu0 0.0
      %v557 = vand.u32 %v203, 4294901760
      %v558 = vsub.f32 %v203, %v557
      %v559 = vand.u32 %v558, 4294901760
      %560 = vmatpush1.msra.mxu0 %v559
      %561 = vmatprep.subr.mxu0 0.0
      %562 = vmatpush1.msra.mxu0 0.0
      %563 = vmatprep.subr.mxu0 0.0
      %564 = vmatpush1.msra.mxu0 0.0
      %565 = vmatprep.subr.mxu0 0.0
      %566 = vmatpush1.msra.mxu0 0.0
      %567 = vmatprep.subr.mxu0 0.0
      %568 = vmatpush1.msra.mxu0 0.0
      %569 = vmatprep.subr.mxu0 0.0
      %570 = vmatpush1.msra.mxu0 0.0
      %571 = vmatprep.subr.mxu0 0.0
      %572 = vmatpush1.msra.mxu0 0.0
      %573 = vmatprep.subr.mxu0 0.0
      %574 = vmatpush1.msra.mxu0 0.0
      %575 = vmatprep.subr.mxu0 0.0
      %576 = vmatpush1.msra.mxu0 0.0
      %577 = vmatprep.subr.mxu0 0.0
      %578 = vmatpush1.msra.mxu0 0.0
      %579 = vmatprep.subr.mxu0 0.0
      %580 = vmatpush1.msra.mxu0 0.0
      %581 = vmatprep.subr.mxu0 0.0
      %582 = vmatpush1.msra.mxu0 0.0
      %583 = vmatprep.subr.mxu0 0.0
      %584 = vmatpush1.msra.mxu0 0.0
      %585 = vmatprep.subr.mxu0 0.0
      %586 = vmatpush1.msra.mxu0 0.0
      %587 = vmatprep.subr.mxu0 0.0
      %588 = vmatpush1.msra.mxu0 0.0
      %589 = vmatprep.subr.mxu0 0.0
      %590 = vmatpush1.msra.mxu0 0.0
      %591 = vmatprep.subr.mxu0 0.0
      %592 = vmatpush1.msra.mxu0 0.0
      %593 = vmatprep.subr.mxu0 0.0
      %594 = vmatpush1.msra.mxu0 0.0
      %595 = vmatprep.subr.mxu0 0.0
      %596 = vmatpush1.msra.mxu0 0.0
      %597 = vmatprep.subr.mxu0 0.0
      %598 = vmatpush1.msra.mxu0 0.0
      %599 = vmatprep.subr.mxu0 0.0
      %600 = vmatpush1.msra.mxu0 0.0
      %601 = vmatprep.subr.mxu0 0.0
      %602 = vmatpush1.msra.mxu0 0.0
      %603 = vmatprep.subr.mxu0 0.0
      %604 = vmatpush1.msra.mxu0 0.0
      %605 = vmatprep.subr.mxu0 0.0
      %606 = vmatpush1.msra.mxu0 0.0
      %607 = vmatprep.subr.mxu0 0.0
      %608 = vmatpush1.msra.mxu0 0.0
      %609 = vmatprep.subr.mxu0 0.0
      %610 = vmatpush1.msra.mxu0 0.0
      %611 = vmatprep.subr.mxu0 0.0
      %612 = vmatpush1.msra.mxu0 0.0
      %613 = vmatprep.subr.mxu0 0.0
      %614 = vmatpush1.msra.mxu0 0.0
      %615 = vmatprep.subr.mxu0 0.0
      %616 = vmatpush1.msra.mxu0 0.0
      %617 = vmatprep.subr.mxu0 0.0
      %618 = vmatpush1.msra.mxu0 0.0
      %619 = vmatprep.subr.mxu0 0.0
      %620 = vmatpush1.msra.mxu0 0.0
      %621 = vmatprep.mubr.f32.mxu0 0.0
      %v622 = vand.u32 %v206, 4294901760
      %623 = vmatmul.mubr.f32.gmra.mrb[0].mxu0 %v622
      %v624 = vpop.f32.mrb[0].mxu0
      %v625 = vadd.f32 %v540, %v624
      %v626 = vpop.f32.mrb[0].mxu0
      %627 = vmatprep.mubr.f32.mxu0 0.0
      %v628 = vand.u32 %v209, 4294901760
      %629 = vmatmul.mubr.f32.gmra.mrb[0].mxu0 %v628
      %v630 = vpop.f32.mrb[0].mxu0
      %v631 = vadd.f32 %v548, %v630
      %v632 = vpop.f32.mrb[0].mxu0
      %633 = vdwg.mxu0
      %634 = vmatprep.subr.mxu0 0.0
      %v635 = vand.u32 %v202, 4294901760
      %636 = vmatpush1.msra.mxu0 %v635
      %637 = vmatprep.subr.mxu0 0.0
      %v638 = vand.u32 %v203, 4294901760
      %639 = vmatpush1.msra.mxu0 %v638
      %640 = vmatprep.subr.mxu0 0.0
      %641 = vmatpush1.msra.mxu0 0.0
      %642 = vmatprep.subr.mxu0 0.0
      %643 = vmatpush1.msra.mxu0 0.0
      %644 = vmatprep.subr.mxu0 0.0
      %645 = vmatpush1.msra.mxu0 0.0
      %646 = vmatprep.subr.mxu0 0.0
      %647 = vmatpush1.msra.mxu0 0.0
      %648 = vmatprep.subr.mxu0 0.0
      %649 = vmatpush1.msra.mxu0 0.0
      %650 = vmatprep.subr.mxu0 0.0
      %651 = vmatpush1.msra.mxu0 0.0
      %652 = vmatprep.subr.mxu0 0.0
      %653 = vmatpush1.msra.mxu0 0.0
      %654 = vmatprep.subr.mxu0 0.0
      %655 = vmatpush1.msra.mxu0 0.0
      %656 = vmatprep.subr.mxu0 0.0
      %657 = vmatpush1.msra.mxu0 0.0
      %658 = vmatprep.subr.mxu0 0.0
      %659 = vmatpush1.msra.mxu0 0.0
      %660 = vmatprep.subr.mxu0 0.0
      %661 = vmatpush1.msra.mxu0 0.0
      %662 = vmatprep.subr.mxu0 0.0
      %663 = vmatpush1.msra.mxu0 0.0
      %664 = vmatprep.subr.mxu0 0.0
      %665 = vmatpush1.msra.mxu0 0.0
      %666 = vmatprep.subr.mxu0 0.0
      %667 = vmatpush1.msra.mxu0 0.0
      %668 = vmatprep.subr.mxu0 0.0
      %669 = vmatpush1.msra.mxu0 0.0
      %670 = vmatprep.subr.mxu0 0.0
      %671 = vmatpush1.msra.mxu0 0.0
      %672 = vmatprep.subr.mxu0 0.0
      %673 = vmatpush1.msra.mxu0 0.0
      %674 = vmatprep.subr.mxu0 0.0
      %675 = vmatpush1.msra.mxu0 0.0
      %676 = vmatprep.subr.mxu0 0.0
      %677 = vmatpush1.msra.mxu0 0.0
      %678 = vmatprep.subr.mxu0 0.0
      %679 = vmatpush1.msra.mxu0 0.0
      %680 = vmatprep.subr.mxu0 0.0
      %681 = vmatpush1.msra.mxu0 0.0
      %682 = vmatprep.subr.mxu0 0.0
      %683 = vmatpush1.msra.mxu0 0.0
      %684 = vmatprep.subr.mxu0 0.0
      %685 = vmatpush1.msra.mxu0 0.0
      %686 = vmatprep.subr.mxu0 0.0
      %687 = vmatpush1.msra.mxu0 0.0
      %688 = vmatprep.subr.mxu0 0.0
      %689 = vmatpush1.msra.mxu0 0.0
      %690 = vmatprep.subr.mxu0 0.0
      %691 = vmatpush1.msra.mxu0 0.0
      %692 = vmatprep.subr.mxu0 0.0
      %693 = vmatpush1.msra.mxu0 0.0
      %694 = vmatprep.subr.mxu0 0.0
      %695 = vmatpush1.msra.mxu0 0.0
      %696 = vmatprep.subr.mxu0 0.0
      %697 = vmatpush1.msra.mxu0 0.0
      %698 = vmatprep.subr.mxu0 0.0
      %699 = vmatpush1.msra.mxu0 0.0
      %700 = vmatprep.mubr.f32.mxu0 0.0
      %v701 = vand.u32 %v206, 4294901760
      %702 = vmatmul.mubr.f32.gmra.mrb[0].mxu0 %v701
      %v703 = vpop.f32.mrb[0].mxu0
      %v704 = vadd.f32 %v625, %v703
      %v705 = vpop.f32.mrb[0].mxu0
      %706 = vmatprep.mubr.f32.mxu0 0.0
      %v707 = vand.u32 %v209, 4294901760
      %708 = vmatmul.mubr.f32.gmra.mrb[0].mxu0 %v707
      %v709 = vpop.f32.mrb[0].mxu0
      %v710 = vadd.f32 %v631, %v709
      %v711 = vpop.f32.mrb[0].mxu0
      %712 = vdwg.mxu0
      %vm713 = vcmask 64512
      %714 = vst.msk [vmem:[%s156] sm:$0xff] %vm713, %v704
      %715 = vst.msk [vmem:[%s156 + $0x8] sm:$0xff] %vm713, %v710
      %v716 = vsub.f32 %v202, %v704
      %v717 = vsub.f32 %v203, %v710
      %718 = vst.msk [vmem:[%s151] sm:$0xff] %vm713, %v716
      %719 = vst.msk [vmem:[%s151 + $0x8] sm:$0xff] %vm713, %v717
      %p720 = scmp.lt.s32.totalorder %s14, 1
      %s721 = scalar_select %p720, %s14, 1
      %s722 = smul.addr %s721, 2
      %s723 = smul.addr %s722, 8
      %s724 = scalar_lea.vmem %s1, %s723
      %p725 = scmp.lt.s32.totalorder %s14, 1
      %s726 = scalar_select %p725, %s14, 1
      %s727 = smul.addr %s726, 2
      %s728 = smul.addr %s727, 8
      %s729 = scalar_lea.vmem %s2, %s728
      // Predicated region
      $region25: #{series_decomp.1} parent=23 // pred_check
        %p730 = pneg %p58
      $region26: #{series_decomp.1} parent=23 // pred_check_branch
        %732 = sbr.rel (%p730) target = $region28
      $region27: #{series_decomp.1} parent=23 // pred_region
        _
      $region28: #{series_decomp.1} parent=23 // pred_fallthru
        _
      // Predicated region
      $region29: #{series_decomp.1} parent=23 // pred_check
        %p733 = pneg %p84
      $region30: #{series_decomp.1} parent=23 // pred_check_branch
        %735 = sbr.rel (%p733) target = $region32
      $region31: #{series_decomp.1} parent=23 // pred_region
        _
      $region32: #{series_decomp.1} parent=23 // pred_fallthru
        _
    $region24: #{series_decomp.1} parent=5 // pred_fallthru
      _
    %p736 = scmp.le.s32.totalorder 2, %s9
    // Predicated region
    $region33: #{series_decomp.1} parent=5 // pred_check
      %p737 = pneg %p736
    $region34: #{series_decomp.1} parent=5 // pred_check_branch
      %739 = sbr.rel (%p737) target = $region36
    $region35: #{series_decomp.1} parent=5 // pred_region
      %s740 = ssub.s32 %s9, 2
      // Predicated region
      $region37: #{series_decomp.1} parent=35 // pred_check
        %p741 = pneg %p64
      $region38: #{series_decomp.1} parent=35 // pred_check_branch
        %743 = sbr.rel (%p741) target = $region40
      $region39: #{series_decomp.1} parent=35 // pred_region
        %p744 = scmp.lt.s32.totalorder %s15, 1
        %s745 = scalar_select %p744, %s15, 1
        %s746 = smul.addr %s745, 2
        %s747 = smul.addr %s746, 8
        %s748 = scalar_lea.vmem %s1, %s747
      $region40: #{series_decomp.1} parent=35 // pred_fallthru
        _
      // Predicated region
      $region41: #{series_decomp.1} parent=35 // pred_check
        %p749 = pneg %p90
      $region42: #{series_decomp.1} parent=35 // pred_check_branch
        %751 = sbr.rel (%p749) target = $region44
      $region43: #{series_decomp.1} parent=35 // pred_region
        %p752 = scmp.lt.s32.totalorder %s15, 1
        %s753 = scalar_select %p752, %s15, 1
        %s754 = smul.addr %s753, 2
        %s755 = smul.addr %s754, 8
        %s756 = scalar_lea.vmem %s2, %s755
      $region44: #{series_decomp.1} parent=35 // pred_fallthru
        _
    $region36: #{series_decomp.1} parent=5 // pred_fallthru
      _
  $region6: #{series_decomp.1} parent=0 // loop_footer
    %s13 = sadd.s32 1, %s9
  $region7: #{series_decomp.1} parent=0 // loop_footer_branch
    %8 = sbr.rel target = $region3
  $region8: #{series_decomp.1} parent=0 // loop_exit
    _

</llo_original>
